<compile_context>
chip_gen: v6e
topology: v6e:2x2x1
jax: 0.10.0
libtpu: 0.0.40
codegen_flags: <defaults>
</compile_context>

<pallas_src>
import jax
import jax.numpy as jnp
from jax import lax
from jax.experimental import pallas as pl
from jax.experimental.pallas import tpu as pltpu


def _bce_with_logits_target_one(x):
    # BCEWithLogitsLoss(x, ones_like(x)) per element == softplus(-x),
    # numerically stable form: max(x, 0) - x + log1p(exp(-|x|)).
    return jnp.maximum(x, 0.0) - x + jnp.log1p(jnp.exp(-jnp.abs(x)))


def _make_kernel(*, T, P, P_pad, Q, TP, neg_weight):
    inv_p = 1.0 / float(P)
    inv_pq = 1.0 / float(P * Q)
    n_w = float(neg_weight)

    def kernel(n1_ref, n2_ref, nneg_ref,     # SMEM scalar-prefetch (flat int32 indices)
               emb_ref,                      # [N*T, F] embedding table, HBM (pl.ANY)
               out_ref,                      # (1, 8, 128) per-P-tile partial loss
               src_buf, pos_buf, neg_buf,    # VMEM gather buffers
               sem,                          # DMA semaphore
               pos_acc, neg_acc):            # (1, 1) f32 raw-sum accumulators
        pt = pl.program_id(0)                # P-tile index ("parallel")
        t = pl.program_id(1)                 # timestep  ("arbitrary", accumulated)

        @pl.when(t == 0)
        def _():
            pos_acc[...] = jnp.zeros_like(pos_acc)
            neg_acc[...] = jnp.zeros_like(neg_acc)

        base = t * P_pad + pt * TP           # flat (t, p) offset of this tile

        def emb_row(node):
            # Row (node * T + t) of the flattened [N*T, F] table is
            # final_emb[node, t, :] (contiguous F floats in HBM).
            return emb_ref.at[pl.ds(node * T + t, 1), :]

        # ---- issue all row-gather DMAs for this tile (src, pos, Q negs/row) ----
        @pl.loop(0, TP)
        def _issue(i):
            row = base + i
            pltpu.make_async_copy(emb_row(n1_ref[row]),
                                  src_buf.at[pl.ds(i, 1), :], sem.at[0]).start()
            pltpu.make_async_copy(emb_row(n2_ref[row]),
                                  pos_buf.at[pl.ds(i, 1), :], sem.at[0]).start()

            @pl.loop(0, Q)
            def _issue_neg(q):
                pltpu.make_async_copy(emb_row(nneg_ref[row * Q + q]),
                                      neg_buf.at[i, pl.ds(q, 1), :], sem.at[0]).start()

        # ---- wait for every issued (1, F) row copy ----
        def _wait_one(dst):
            pltpu.make_async_copy(emb_ref.at[pl.ds(0, 1), :], dst, sem.at[0]).wait()

        @pl.loop(0, TP)
        def _wait(i):
            _wait_one(src_buf.at[pl.ds(0, 1), :])
            _wait_one(pos_buf.at[pl.ds(0, 1), :])

            @pl.loop(0, Q)
            def _wait_neg(q):
                _wait_one(neg_buf.at[0, pl.ds(0, 1), :])

        # ---- score + BCE(target=1) math (same structure as the reference) ----
        src = src_buf[...]                                        # [TP, F]
        pos = pos_buf[...]                                        # [TP, F]
        neg = neg_buf[...]                                        # [TP, Q, F]

        pos_score = jnp.sum(src * pos, axis=-1, keepdims=True)    # [TP, 1]
        neg_score = -jnp.sum(src[:, None, :] * neg, axis=-1)      # [TP, Q]

        pos_score = jnp.where(jnp.isnan(pos_score), 0.5, pos_score)
        neg_score = jnp.where(jnp.isnan(neg_score), 0.5, neg_score)

        pos_sp = _bce_with_logits_target_one(pos_score)           # [TP, 1]
        neg_sp = _bce_with_logits_target_one(neg_score)           # [TP, Q]

        # Mask padded tail rows (global p >= P) so tiled means match exactly.
        p_ids = pt * TP + lax.broadcasted_iota(jnp.int32, (TP, 1), 0)
        valid = (p_ids < P).astype(jnp.float32)                   # [TP, 1]

        pos_acc[...] += jnp.sum(pos_sp * valid, axis=(0, 1), keepdims=True)
        neg_acc[...] += jnp.sum(neg_sp * valid, axis=(0, 1), keepdims=True)

        # TODO(synk): the PyTorch `if len(pos_score) == 0: continue` dynamic
        # empty-timestep guard is not reproduced (P, Q are static and > 0 here).

        @pl.when(t == pl.num_programs(1) - 1)
        def _():
            total = pos_acc[...] * inv_p + n_w * (neg_acc[...] * inv_pq)   # (1, 1)
            out_ref[...] = jnp.broadcast_to(total, out_ref.shape)

    return kernel


def dysat_loss_pallas(final_emb, node_1, node_2, node_2_negative,
                      neg_weight=1.0, tile_p=None):
    """final_emb: [N, T, F]; node_1/node_2: [T, P] int; node_2_negative: [T, P, Q] int."""
    final_emb = final_emb.astype(jnp.float32)
    N, T, F = final_emb.shape
    Tn, P = node_1.shape
    Q = node_2_negative.shape[2]
    assert Tn == T and node_2.shape == (T, P) and node_2_negative.shape == (T, P, Q)
    assert P > 0 and Q > 0

    def round_up(a, b):
        return -(-a // b) * b

    # Pick a P tile so the gather buffers stay comfortably inside VMEM.
    if tile_p is None:
        budget = 4 * 1024 * 1024                       # ~4 MiB for the neg buffer
        tile_p = max(8, (budget // (Q * F * 4)) // 8 * 8)
    TP = max(8, round_up(min(tile_p, round_up(P, 8)), 8))
    P_pad = round_up(P, TP)
    num_pt = P_pad // TP

    # Pad + flatten index tensors for SMEM scalar prefetch (1-D avoids SMEM
    # 2-D padding blowup).  Padded rows point at node 0 and are masked in-kernel.
    pad = P_pad - P
    n1 = node_1.astype(jnp.int32)
    n2 = node_2.astype(jnp.int32)
    nn = node_2_negative.astype(jnp.int32)
    if pad:
        n1 = jnp.pad(n1, ((0, 0), (0, pad)))
        n2 = jnp.pad(n2, ((0, 0), (0, pad)))
        nn = jnp.pad(nn, ((0, 0), (0, pad), (0, 0)))
    n1_flat = n1.reshape(-1)                           # [T * P_pad]
    n2_flat = n2.reshape(-1)                           # [T * P_pad]
    nn_flat = nn.reshape(-1)                           # [T * P_pad * Q]

    emb2d = final_emb.reshape(N * T, F)                # row n*T + t == final_emb[n, t]

    kernel = _make_kernel(T=T, P=P, P_pad=P_pad, Q=Q, TP=TP, neg_weight=neg_weight)

    out = pl.pallas_call(
        kernel,
        out_shape=jax.ShapeDtypeStruct((num_pt, 8, 128), jnp.float32),
        grid_spec=pltpu.PrefetchScalarGridSpec(
            num_scalar_prefetch=3,
            grid=(num_pt, T),
            in_specs=[pl.BlockSpec(memory_space=pl.ANY)],          # emb table stays in HBM
            out_specs=pl.BlockSpec((1, 8, 128), lambda pt, t, *_: (pt, 0, 0)),
            scratch_shapes=[
                pltpu.VMEM((TP, F), jnp.float32),                  # src rows
                pltpu.VMEM((TP, F), jnp.float32),                  # pos rows
                pltpu.VMEM((TP, Q, F), jnp.float32),               # neg rows
                pltpu.SemaphoreType.DMA((1,)),
                pltpu.VMEM((1, 1), jnp.float32),                   # sum softplus(pos)
                pltpu.VMEM((1, 1), jnp.float32),                   # sum softplus(neg)
            ]),
        compiler_params=pltpu.CompilerParams(
            dimension_semantics=("parallel", "arbitrary"),
            vmem_limit_bytes=32 * 1024 * 1024,
        ),
    )(n1_flat, n2_flat, nn_flat, emb2d)

    return jnp.sum(out[:, 0, 0])


def dysat_loss_ref(final_emb, node_1, node_2, node_2_negative, neg_weight=1.0):
    """Pure-JAX reference mirroring the PyTorch loop (for correctness check)."""
    T = final_emb.shape[1]
    total = jnp.float32(0.0)
    for t in range(T):
        emb_t = final_emb[:, t, :]
        src = emb_t[node_1[t]]
        pos = emb_t[node_2[t]]
        neg = emb_t[node_2_negative[t]]
        pos_score = jnp.sum(src * pos, axis=1)
        neg_score = -jnp.sum(src[:, None, :] * neg, axis=2).flatten()
        pos_score = jnp.where(jnp.isnan(pos_score), 0.5, pos_score)
        neg_score = jnp.where(jnp.isnan(neg_score), 0.5, neg_score)
        pos_loss = jnp.mean(_bce_with_logits_target_one(pos_score))
        neg_loss = jnp.mean(_bce_with_logits_target_one(neg_score))
        total = total + pos_loss + neg_weight * neg_loss
    return total


if __name__ == "__main__":
    # Small deterministic example: N nodes, T timesteps, F features,
    # P positive pairs per timestep, Q negatives per positive pair.
    N, T, F = 37, 3, 128
    P, Q = 12, 8
    NEG_WEIGHT = 0.7  # args.neg_weight

    key = jax.random.PRNGKey(0)
    k_emb, k1, k2, k3 = jax.random.split(key, 4)
    final_emb = jax.random.normal(k_emb, (N, T, F), dtype=jnp.float32)
    node_1 = jax.random.randint(k1, (T, P), 0, N, dtype=jnp.int32)
    node_2 = jax.random.randint(k2, (T, P), 0, N, dtype=jnp.int32)
    node_2_negative = jax.random.randint(k3, (T, P, Q), 0, N, dtype=jnp.int32)

    # tile_p=8 -> two P tiles (the second partially padded) so the P tiling,
    # the "parallel" axis, and the tail-row masking are all exercised.
    loss = dysat_loss_pallas(final_emb, node_1, node_2, node_2_negative,
                             neg_weight=NEG_WEIGHT, tile_p=8)
    loss = jax.block_until_ready(loss)

    ref = dysat_loss_ref(final_emb, node_1, node_2, node_2_negative, NEG_WEIGHT)
    assert jnp.allclose(loss, ref, rtol=1e-5, atol=1e-5), (loss, ref)
    print("KERNEL_OK")
</pallas_src>

<mosaic_0001>
module attributes {stable_mosaic.version = 11 : i64} {
  func.func @kernel(%arg0: i32, %arg1: i32, %arg2: memref<48xi32, #tpu.memory_space<smem>>, %arg3: memref<48xi32, #tpu.memory_space<smem>>, %arg4: memref<384xi32, #tpu.memory_space<smem>>, %arg5: memref<111x128xf32, #tpu.memory_space<any>>, %arg6: memref<1x8x128xf32, #tpu.memory_space<vmem>>, %arg7: memref<8x128xf32, #tpu.memory_space<vmem>>, %arg8: memref<8x128xf32, #tpu.memory_space<vmem>>, %arg9: memref<8x8x128xf32, #tpu.memory_space<vmem>>, %arg10: memref<1x!tpu.dma_semaphore, #tpu.memory_space<semaphore_mem>>, %arg11: memref<1x1xf32, #tpu.memory_space<vmem>>, %arg12: memref<1x1xf32, #tpu.memory_space<vmem>>) attributes {dimension_semantics = [#tpu.dimension_semantics<parallel>, #tpu.dimension_semantics<arbitrary>], iteration_bounds = array<i64: 2, 3>, scalar_prefetch = 3 : i64, scratch_operands = 6 : i64, tpu.core_type = #tpu.core_type<tc>, window_params = [{}, {transform_indices = @transform_1, window_bounds = array<i64: 1, 8, 128>}]} {
    %c0_i32 = arith.constant 0 : i32
    %0 = arith.cmpi eq, %arg1, %c0_i32 : i32
    %1 = arith.extui %0 : i1 to i32
    %c0_i32_0 = arith.constant 0 : i32
    %2 = arith.cmpi ne, %1, %c0_i32_0 : i32
    scf.if %2 {
      %cst_33 = arith.constant 0.000000e+00 : f32
      %74 = vector.broadcast %cst_33 : f32 to vector<1x1xf32>
      %c0_34 = arith.constant 0 : index
      %c0_35 = arith.constant 0 : index
      %75 = vector.load %arg11[%c0_34, %c0_35] : memref<1x1xf32, #tpu.memory_space<vmem>>, vector<1x1xf32>
      tpu.vector_store %arg11[%c0_34, %c0_35], %74 {strides = array<i32>} : memref<1x1xf32, #tpu.memory_space<vmem>>, vector<1x1xf32>,
      %cst_36 = arith.constant 0.000000e+00 : f32
      %76 = vector.broadcast %cst_36 : f32 to vector<1x1xf32>
      %c0_37 = arith.constant 0 : index
      %c0_38 = arith.constant 0 : index
      %77 = vector.load %arg12[%c0_37, %c0_38] : memref<1x1xf32, #tpu.memory_space<vmem>>, vector<1x1xf32>
      tpu.vector_store %arg12[%c0_37, %c0_38], %76 {strides = array<i32>} : memref<1x1xf32, #tpu.memory_space<vmem>>, vector<1x1xf32>,
    } else {
    }
    %c16_i32 = arith.constant 16 : i32
    %3 = arith.muli %arg1, %c16_i32 : i32
    %c8_i32 = arith.constant 8 : i32
    %4 = arith.muli %arg0, %c8_i32 : i32
    %5 = arith.addi %3, %4 : i32
    %c0_i32_1 = arith.constant 0 : i32
    %c8_i32_2 = arith.constant 8 : i32
    %6 = arith.addi %c0_i32_1, %c8_i32_2 : i32
    %c1_i32 = arith.constant 1 : i32
    scf.for %arg13 = %c0_i32_1 to %6 step %c1_i32  : i32 {
      %c1_i32_33 = arith.constant 1 : i32
      %74 = arith.muli %arg13, %c1_i32_33 : i32
      %c0_i32_34 = arith.constant 0 : i32
      %75 = arith.addi %c0_i32_34, %74 : i32
      %76 = arith.addi %5, %75 : i32
      %77 = arith.index_cast %76 : i32 to index
      %78 = memref.load %arg2[%77] : memref<48xi32, #tpu.memory_space<smem>>
      %c3_i32 = arith.constant 3 : i32
      %79 = arith.muli %78, %c3_i32 : i32
      %80 = arith.addi %79, %arg1 : i32
      %c0_i32_35 = arith.constant 0 : i32
      %c0_i32_36 = arith.constant 0 : i32
      %81 = tpu.memref_slice %arg5[%80, %c0_i32_36] : memref<111x128xf32, #tpu.memory_space<any>> -> memref<1x128xf32, #tpu.memory_space<any>>
      %c0_i32_37 = arith.constant 0 : i32
      %82 = tpu.memref_slice %arg7[%75, %c0_i32_37] : memref<8x128xf32, #tpu.memory_space<vmem>> -> memref<1x128xf32, #tpu.memory_space<vmem>>
      %83 = tpu.memref_slice %arg10[%c0_i32_35] : memref<1x!tpu.dma_semaphore, #tpu.memory_space<semaphore_mem>> -> memref<1x!tpu.dma_semaphore, #tpu.memory_space<semaphore_mem>>
      %84 = tpu.memref_squeeze %83 : memref<1x!tpu.dma_semaphore, #tpu.memory_space<semaphore_mem>> -> memref<!tpu.dma_semaphore, #tpu.memory_space<semaphore_mem>>
      tpu.enqueue_dma source(%81 : memref<1x128xf32, #tpu.memory_space<any>>) target(%82 : memref<1x128xf32, #tpu.memory_space<vmem>>) target_semaphore(%84 : memref<!tpu.dma_semaphore, #tpu.memory_space<semaphore_mem>>)
      %85 = arith.index_cast %76 : i32 to index
      %86 = memref.load %arg3[%85] : memref<48xi32, #tpu.memory_space<smem>>
      %c3_i32_38 = arith.constant 3 : i32
      %87 = arith.muli %86, %c3_i32_38 : i32
      %88 = arith.addi %87, %arg1 : i32
      %c0_i32_39 = arith.constant 0 : i32
      %c0_i32_40 = arith.constant 0 : i32
      %89 = tpu.memref_slice %arg5[%88, %c0_i32_40] : memref<111x128xf32, #tpu.memory_space<any>> -> memref<1x128xf32, #tpu.memory_space<any>>
      %c0_i32_41 = arith.constant 0 : i32
      %90 = tpu.memref_slice %arg8[%75, %c0_i32_41] : memref<8x128xf32, #tpu.memory_space<vmem>> -> memref<1x128xf32, #tpu.memory_space<vmem>>
      %91 = tpu.memref_slice %arg10[%c0_i32_39] : memref<1x!tpu.dma_semaphore, #tpu.memory_space<semaphore_mem>> -> memref<1x!tpu.dma_semaphore, #tpu.memory_space<semaphore_mem>>
      %92 = tpu.memref_squeeze %91 : memref<1x!tpu.dma_semaphore, #tpu.memory_space<semaphore_mem>> -> memref<!tpu.dma_semaphore, #tpu.memory_space<semaphore_mem>>
      tpu.enqueue_dma source(%89 : memref<1x128xf32, #tpu.memory_space<any>>) target(%90 : memref<1x128xf32, #tpu.memory_space<vmem>>) target_semaphore(%92 : memref<!tpu.dma_semaphore, #tpu.memory_space<semaphore_mem>>)
      %c0_i32_42 = arith.constant 0 : i32
      %c8_i32_43 = arith.constant 8 : i32
      %93 = arith.addi %c0_i32_42, %c8_i32_43 : i32
      %c1_i32_44 = arith.constant 1 : i32
      scf.for %arg14 = %c0_i32_42 to %93 step %c1_i32_44  : i32 {
        %c1_i32_46 = arith.constant 1 : i32
        %94 = arith.muli %arg14, %c1_i32_46 : i32
        %c0_i32_47 = arith.constant 0 : i32
        %95 = arith.addi %c0_i32_47, %94 : i32
        %c8_i32_48 = arith.constant 8 : i32
        %96 = arith.muli %76, %c8_i32_48 : i32
        %97 = arith.addi %96, %95 : i32
        %98 = arith.index_cast %97 : i32 to index
        %99 = memref.load %arg4[%98] : memref<384xi32, #tpu.memory_space<smem>>
        %c3_i32_49 = arith.constant 3 : i32
        %100 = arith.muli %99, %c3_i32_49 : i32
        %101 = arith.addi %100, %arg1 : i32
        %c0_i32_50 = arith.constant 0 : i32
        %c0_i32_51 = arith.constant 0 : i32
        %102 = tpu.memref_slice %arg5[%101, %c0_i32_51] : memref<111x128xf32, #tpu.memory_space<any>> -> memref<1x128xf32, #tpu.memory_space<any>>
        %c0_i32_52 = arith.constant 0 : i32
        %103 = tpu.memref_slice %arg9[%75, %95, %c0_i32_52] : memref<8x8x128xf32, #tpu.memory_space<vmem>> -> memref<1x1x128xf32, #tpu.memory_space<vmem>>
        %104 = tpu.memref_squeeze %103 : memref<1x1x128xf32, #tpu.memory_space<vmem>> -> memref<1x128xf32, #tpu.memory_space<vmem>>
        %105 = tpu.memref_slice %arg10[%c0_i32_50] : memref<1x!tpu.dma_semaphore, #tpu.memory_space<semaphore_mem>> -> memref<1x!tpu.dma_semaphore, #tpu.memory_space<semaphore_mem>>
        %106 = tpu.memref_squeeze %105 : memref<1x!tpu.dma_semaphore, #tpu.memory_space<semaphore_mem>> -> memref<!tpu.dma_semaphore, #tpu.memory_space<semaphore_mem>>
        tpu.enqueue_dma source(%102 : memref<1x128xf32, #tpu.memory_space<any>>) target(%104 : memref<1x128xf32, #tpu.memory_space<vmem>>) target_semaphore(%106 : memref<!tpu.dma_semaphore, #tpu.memory_space<semaphore_mem>>)
      }
      %c8_i32_45 = arith.constant 8 : i32
    }
    %c8_i32_3 = arith.constant 8 : i32
    %c0_i32_4 = arith.constant 0 : i32
    %c8_i32_5 = arith.constant 8 : i32
    %7 = arith.addi %c0_i32_4, %c8_i32_5 : i32
    %c1_i32_6 = arith.constant 1 : i32
    scf.for %arg13 = %c0_i32_4 to %7 step %c1_i32_6  : i32 {
      %c0_i32_33 = arith.constant 0 : i32
      %c0_i32_34 = arith.constant 0 : i32
      %c0_i32_35 = arith.constant 0 : i32
      %74 = tpu.memref_slice %arg5[%c0_i32_34, %c0_i32_35] : memref<111x128xf32, #tpu.memory_space<any>> -> memref<1x128xf32, #tpu.memory_space<any>>
      %c0_i32_36 = arith.constant 0 : i32
      %c0_i32_37 = arith.constant 0 : i32
      %75 = tpu.memref_slice %arg7[%c0_i32_36, %c0_i32_37] : memref<8x128xf32, #tpu.memory_space<vmem>> -> memref<1x128xf32, #tpu.memory_space<vmem>>
      %76 = tpu.memref_slice %arg10[%c0_i32_33] : memref<1x!tpu.dma_semaphore, #tpu.memory_space<semaphore_mem>> -> memref<1x!tpu.dma_semaphore, #tpu.memory_space<semaphore_mem>>
      %77 = tpu.memref_squeeze %76 : memref<1x!tpu.dma_semaphore, #tpu.memory_space<semaphore_mem>> -> memref<!tpu.dma_semaphore, #tpu.memory_space<semaphore_mem>>
      tpu.wait_dma2 semaphore(%77 : memref<!tpu.dma_semaphore, #tpu.memory_space<semaphore_mem>>) src(%74 : memref<1x128xf32, #tpu.memory_space<any>>) dst(%75 : memref<1x128xf32, #tpu.memory_space<vmem>>)
      %c0_i32_38 = arith.constant 0 : i32
      %c0_i32_39 = arith.constant 0 : i32
      %c0_i32_40 = arith.constant 0 : i32
      %78 = tpu.memref_slice %arg5[%c0_i32_39, %c0_i32_40] : memref<111x128xf32, #tpu.memory_space<any>> -> memref<1x128xf32, #tpu.memory_space<any>>
      %c0_i32_41 = arith.constant 0 : i32
      %c0_i32_42 = arith.constant 0 : i32
      %79 = tpu.memref_slice %arg8[%c0_i32_41, %c0_i32_42] : memref<8x128xf32, #tpu.memory_space<vmem>> -> memref<1x128xf32, #tpu.memory_space<vmem>>
      %80 = tpu.memref_slice %arg10[%c0_i32_38] : memref<1x!tpu.dma_semaphore, #tpu.memory_space<semaphore_mem>> -> memref<1x!tpu.dma_semaphore, #tpu.memory_space<semaphore_mem>>
      %81 = tpu.memref_squeeze %80 : memref<1x!tpu.dma_semaphore, #tpu.memory_space<semaphore_mem>> -> memref<!tpu.dma_semaphore, #tpu.memory_space<semaphore_mem>>
      tpu.wait_dma2 semaphore(%81 : memref<!tpu.dma_semaphore, #tpu.memory_space<semaphore_mem>>) src(%78 : memref<1x128xf32, #tpu.memory_space<any>>) dst(%79 : memref<1x128xf32, #tpu.memory_space<vmem>>)
      %c0_i32_43 = arith.constant 0 : i32
      %c8_i32_44 = arith.constant 8 : i32
      %82 = arith.addi %c0_i32_43, %c8_i32_44 : i32
      %c1_i32_45 = arith.constant 1 : i32
      scf.for %arg14 = %c0_i32_43 to %82 step %c1_i32_45  : i32 {
        %c0_i32_46 = arith.constant 0 : i32
        %c0_i32_47 = arith.constant 0 : i32
        %c0_i32_48 = arith.constant 0 : i32
        %c0_i32_49 = arith.constant 0 : i32
        %83 = tpu.memref_slice %arg5[%c0_i32_48, %c0_i32_49] : memref<111x128xf32, #tpu.memory_space<any>> -> memref<1x128xf32, #tpu.memory_space<any>>
        %c0_i32_50 = arith.constant 0 : i32
        %c0_i32_51 = arith.constant 0 : i32
        %84 = tpu.memref_slice %arg9[%c0_i32_46, %c0_i32_50, %c0_i32_51] : memref<8x8x128xf32, #tpu.memory_space<vmem>> -> memref<1x1x128xf32, #tpu.memory_space<vmem>>
        %85 = tpu.memref_squeeze %84 : memref<1x1x128xf32, #tpu.memory_space<vmem>> -> memref<1x128xf32, #tpu.memory_space<vmem>>
        %86 = tpu.memref_slice %arg10[%c0_i32_47] : memref<1x!tpu.dma_semaphore, #tpu.memory_space<semaphore_mem>> -> memref<1x!tpu.dma_semaphore, #tpu.memory_space<semaphore_mem>>
        %87 = tpu.memref_squeeze %86 : memref<1x!tpu.dma_semaphore, #tpu.memory_space<semaphore_mem>> -> memref<!tpu.dma_semaphore, #tpu.memory_space<semaphore_mem>>
        tpu.wait_dma2 semaphore(%87 : memref<!tpu.dma_semaphore, #tpu.memory_space<semaphore_mem>>) src(%83 : memref<1x128xf32, #tpu.memory_space<any>>) dst(%85 : memref<1x128xf32, #tpu.memory_space<vmem>>)
      }
    }
    %c0 = arith.constant 0 : index
    %c0_7 = arith.constant 0 : index
    %8 = vector.load %arg7[%c0, %c0_7] : memref<8x128xf32, #tpu.memory_space<vmem>>, vector<8x128xf32>
    %c0_8 = arith.constant 0 : index
    %c0_9 = arith.constant 0 : index
    %9 = vector.load %arg8[%c0_8, %c0_9] : memref<8x128xf32, #tpu.memory_space<vmem>>, vector<8x128xf32>
    %c0_10 = arith.constant 0 : index
    %c0_11 = arith.constant 0 : index
    %c0_12 = arith.constant 0 : index
    %10 = vector.load %arg9[%c0_10, %c0_11, %c0_12] : memref<8x8x128xf32, #tpu.memory_space<vmem>>, vector<8x8x128xf32>
    %11 = arith.mulf %8, %9 : vector<8x128xf32>
    %cst = arith.constant dense<0.000000e+00> : vector<8xf32>
    %12 = vector.multi_reduction <add>, %11, %cst [1] : vector<8x128xf32> to vector<8xf32>
    %13 = vector.shape_cast %12 : vector<8xf32> to vector<8x1xf32>
    %14 = vector.shape_cast %8 : vector<8x128xf32> to vector<8x1x128xf32>
    %15 = vector.broadcast %14 : vector<8x1x128xf32> to vector<8x8x128xf32>
    %16 = arith.mulf %15, %10 : vector<8x8x128xf32>
    %cst_13 = arith.constant dense<0.000000e+00> : vector<8x8xf32>
    %17 = vector.multi_reduction <add>, %16, %cst_13 [2] : vector<8x8x128xf32> to vector<8x8xf32>
    %cst_14 = arith.constant 0.000000e+00 : f32
    %18 = vector.broadcast %cst_14 : f32 to vector<8x8xf32>
    %19 = arith.subf %18, %17 : vector<8x8xf32>
    %20 = arith.cmpf one, %13, %13 : vector<8x1xf32>
    %cst_15 = arith.constant 5.000000e-01 : f32
    %21 = vector.broadcast %cst_15 : f32 to vector<8x1xf32>
    %22 = arith.select %20, %21, %13 : vector<8x1xi1>, vector<8x1xf32>
    %23 = arith.cmpf one, %19, %19 : vector<8x8xf32>
    %cst_16 = arith.constant 5.000000e-01 : f32
    %24 = vector.broadcast %cst_16 : f32 to vector<8x8xf32>
    %25 = arith.select %23, %24, %19 : vector<8x8xi1>, vector<8x8xf32>
    %cst_17 = arith.constant 0.000000e+00 : f32
    %26 = vector.broadcast %cst_17 : f32 to vector<8x1xf32>
    %27 = arith.maximumf %22, %26 : vector<8x1xf32>
    %28 = arith.subf %27, %22 : vector<8x1xf32>
    %29 = math.absf %22 : vector<8x1xf32>
    %cst_18 = arith.constant 0.000000e+00 : f32
    %30 = vector.broadcast %cst_18 : f32 to vector<8x1xf32>
    %31 = arith.subf %30, %29 : vector<8x1xf32>
    %32 = math.exp %31 : vector<8x1xf32>
    %33 = math.log1p %32 : vector<8x1xf32>
    %34 = arith.addf %28, %33 : vector<8x1xf32>
    %cst_19 = arith.constant 0.000000e+00 : f32
    %35 = vector.broadcast %cst_19 : f32 to vector<8x8xf32>
    %36 = arith.maximumf %25, %35 : vector<8x8xf32>
    %37 = arith.subf %36, %25 : vector<8x8xf32>
    %38 = math.absf %25 : vector<8x8xf32>
    %cst_20 = arith.constant 0.000000e+00 : f32
    %39 = vector.broadcast %cst_20 : f32 to vector<8x8xf32>
    %40 = arith.subf %39, %38 : vector<8x8xf32>
    %41 = math.exp %40 : vector<8x8xf32>
    %42 = math.log1p %41 : vector<8x8xf32>
    %43 = arith.addf %37, %42 : vector<8x8xf32>
    %c8_i32_21 = arith.constant 8 : i32
    %44 = arith.muli %arg0, %c8_i32_21 : i32
    %45 = tpu.iota {dimensions = array<i32: 0>} : vector<8x1xi32>
    %46 = vector.broadcast %44 : i32 to vector<8x1xi32>
    %47 = arith.addi %46, %45 : vector<8x1xi32>
    %c12_i32 = arith.constant 12 : i32
    %48 = vector.broadcast %c12_i32 : i32 to vector<8x1xi32>
    %49 = arith.cmpi slt, %47, %48 : vector<8x1xi32>
    %50 = arith.extui %49 : vector<8x1xi1> to vector<8x1xi32>
    %51 = arith.sitofp %50 : vector<8x1xi32> to vector<8x1xf32>
    %c0_22 = arith.constant 0 : index
    %c0_23 = arith.constant 0 : index
    %52 = vector.load %arg11[%c0_22, %c0_23] : memref<1x1xf32, #tpu.memory_space<vmem>>, vector<1x1xf32>
    %53 = arith.mulf %34, %51 : vector<8x1xf32>
    %54 = vector.shape_cast %53 : vector<8x1xf32> to vector<1x8x1xf32>
    %cst_24 = arith.constant dense<0.000000e+00> : vector<1xf32>
    %55 = vector.multi_reduction <add>, %54, %cst_24 [1, 2] : vector<1x8x1xf32> to vector<1xf32>
    %56 = vector.shape_cast %55 : vector<1xf32> to vector<1x1x1xf32>
    %57 = vector.extract %56[0, 0, 0] : f32 from vector<1x1x1xf32>
    %58 = vector.broadcast %57 : f32 to vector<1x1xf32>
    %59 = arith.addf %52, %58 : vector<1x1xf32>
    %c0_25 = arith.constant 0 : index
    %c0_26 = arith.constant 0 : index
    %60 = vector.load %arg11[%c0_25, %c0_26] : memref<1x1xf32, #tpu.memory_space<vmem>>, vector<1x1xf32>
    tpu.vector_store %arg11[%c0_25, %c0_26], %59 {strides = array<i32>} : memref<1x1xf32, #tpu.memory_space<vmem>>, vector<1x1xf32>,
    %c0_27 = arith.constant 0 : index
    %c0_28 = arith.constant 0 : index
    %61 = vector.load %arg12[%c0_27, %c0_28] : memref<1x1xf32, #tpu.memory_space<vmem>>, vector<1x1xf32>
    %62 = vector.broadcast %51 : vector<8x1xf32> to vector<8x8xf32>
    %63 = arith.mulf %43, %62 : vector<8x8xf32>
    %64 = vector.shape_cast %63 : vector<8x8xf32> to vector<1x8x8xf32>
    %cst_29 = arith.constant dense<0.000000e+00> : vector<1xf32>
    %65 = vector.multi_reduction <add>, %64, %cst_29 [1, 2] : vector<1x8x8xf32> to vector<1xf32>
    %66 = vector.shape_cast %65 : vector<1xf32> to vector<1x1x1xf32>
    %67 = vector.extract %66[0, 0, 0] : f32 from vector<1x1x1xf32>
    %68 = vector.broadcast %67 : f32 to vector<1x1xf32>
    %69 = arith.addf %61, %68 : vector<1x1xf32>
    %c0_30 = arith.constant 0 : index
    %c0_31 = arith.constant 0 : index
    %70 = vector.load %arg12[%c0_30, %c0_31] : memref<1x1xf32, #tpu.memory_space<vmem>>, vector<1x1xf32>
    tpu.vector_store %arg12[%c0_30, %c0_31], %69 {strides = array<i32>} : memref<1x1xf32, #tpu.memory_space<vmem>>, vector<1x1xf32>,
    %c2_i32 = arith.constant 2 : i32
    %71 = arith.cmpi eq, %arg1, %c2_i32 : i32
    %72 = arith.extui %71 : i1 to i32
    %c0_i32_32 = arith.constant 0 : i32
    %73 = arith.cmpi ne, %72, %c0_i32_32 : i32
    scf.if %73 {
      %c0_33 = arith.constant 0 : index
      %c0_34 = arith.constant 0 : index
      %74 = vector.load %arg11[%c0_33, %c0_34] : memref<1x1xf32, #tpu.memory_space<vmem>>, vector<1x1xf32>
      %cst_35 = arith.constant 0.0833333358 : f32
      %75 = vector.broadcast %cst_35 : f32 to vector<1x1xf32>
      %76 = arith.mulf %74, %75 : vector<1x1xf32>
      %c0_36 = arith.constant 0 : index
      %c0_37 = arith.constant 0 : index
      %77 = vector.load %arg12[%c0_36, %c0_37] : memref<1x1xf32, #tpu.memory_space<vmem>>, vector<1x1xf32>
      %cst_38 = arith.constant 0.010416667 : f32
      %78 = vector.broadcast %cst_38 : f32 to vector<1x1xf32>
      %79 = arith.mulf %77, %78 : vector<1x1xf32>
      %cst_39 = arith.constant 0.699999988 : f32
      %80 = vector.broadcast %cst_39 : f32 to vector<1x1xf32>
      %81 = arith.mulf %80, %79 : vector<1x1xf32>
      %82 = arith.addf %76, %81 : vector<1x1xf32>
      %83 = vector.shape_cast %82 : vector<1x1xf32> to vector<1x1x1xf32>
      %84 = vector.broadcast %83 : vector<1x1x1xf32> to vector<1x8x128xf32>
      %c0_40 = arith.constant 0 : index
      %c0_41 = arith.constant 0 : index
      %c0_42 = arith.constant 0 : index
      %85 = vector.load %arg6[%c0_40, %c0_41, %c0_42] : memref<1x8x128xf32, #tpu.memory_space<vmem>>, vector<1x8x128xf32>
      tpu.vector_store %arg6[%c0_40, %c0_41, %c0_42], %84 {strides = array<i32>} : memref<1x8x128xf32, #tpu.memory_space<vmem>>, vector<1x8x128xf32>,
    } else {
    }
    return
  }
  func.func @transform_1(%arg0: i32, %arg1: i32, %arg2: memref<48xi32, #tpu.memory_space<smem>>, %arg3: memref<48xi32, #tpu.memory_space<smem>>, %arg4: memref<384xi32, #tpu.memory_space<smem>>) -> (i32, i32, i32) {
    %c0_i32 = arith.constant 0 : i32
    %c0_i32_0 = arith.constant 0 : i32
    %c0_i32_1 = arith.constant 0 : i32
    return %arg0, %c0_i32, %c0_i32_0 : i32, i32, i32
  }
}

</mosaic_0001>

<llo_original>
// kernel: tpu_custom_call.1
$region0: #{tpu_custom_call.1}
  #allocation0 [shape = 'u32[]', space=smem, size = 0x4, offset = 0x4, fixed_abs, tag = 'smem constant byte address 0x4 - core index']
  #allocation1 [shape = 'u32[144,128]{1,0:T(1,128)}', space=vmem, size = 0x12000, scoped, tag = 'internal scratch']
  #allocation2 [shape = 'f32[8,128]{1,0:T(8,128)}', space=vmem, size = 0x1000, scoped, tag = 'scratch operand']
  #allocation3 [shape = 'f32[8,128]{1,0:T(8,128)}', space=vmem, size = 0x1000, scoped, tag = 'scratch operand']
  #allocation4 [shape = 'f32[8,8,128]{2,1,0:T(8,128)}', space=vmem, size = 0x8000, scoped, tag = 'scratch operand']
  #allocation5 [shape = 's32[1]{0}', space=sflag, size = 0x4, scoped, tag = 'scratch operand']
  #allocation6 [shape = 'f32[1,1]{1,0:T(1,128)}', space=vmem, size = 0x200, scoped, tag = 'scratch operand']
  #allocation7 [shape = 'f32[1,1]{1,0:T(1,128)}', space=vmem, size = 0x200, scoped, tag = 'scratch operand']
  #allocation8 [shape = 's32[1]{0}', space=sflag, size = 0x4, scoped, tag = 'scoped memory for tpu_custom_call.1']
  #allocation9 [shape = 'u8[512]{0}', space=smem, size = 0x200, scoped, tag = 'prefetched SMEM operand 0']
  #allocation10 [shape = 'u8[512]{0}', space=smem, size = 0x200, scoped, tag = 'prefetched SMEM operand 1']
  #allocation11 [shape = 'u8[1536]{0}', space=smem, size = 0x600, scoped, tag = 'prefetched SMEM operand 2']
  #allocation14 [shape = 's32[]', space=sflag, size = 0x4, offset = 0, fixed_abs, tag = 'sflag constant byte address 0x0 - dummy sync flag']
  #allocation15 [shape = 's32[]', space=sflag, size = 0x4, offset = 0, fixed_abs, tag = 'sflag constant byte address 0x0 - dummy sync flag']
  #allocation16 [shape = 'u32[]', space=smem, size = 0x4, offset = 0x44, fixed_abs, tag = 'smem constant byte address 0x44 - assertion arg 0']
  #allocation17 [shape = 'u32[]', space=smem, size = 0x4, offset = 0x48, fixed_abs, tag = 'smem constant byte address 0x48 - assertion arg 1']
  #allocation18 [shape = 's32[]', space=sflag, size = 0x4, offset = 0, fixed_abs, tag = 'sflag constant byte address 0x0 - dummy sync flag']
  #allocation19 [shape = 's32[]', space=sflag, size = 0x4, offset = 0, fixed_abs, tag = 'sflag constant byte address 0x0 - dummy sync flag']
  #allocation20 [shape = 's32[]', space=sflag, size = 0x4, offset = 0, fixed_abs, tag = 'sflag constant byte address 0x0 - dummy sync flag']
  #allocation21 [shape = 's32[]', space=sflag, size = 0x4, offset = 0, fixed_abs, tag = 'sflag constant byte address 0x0 - dummy sync flag']
  %s0 = inlined_call_operand.hbm [shape: s32[48], index: 0, kind: input, shape index: {}]
  %s1 = inlined_call_operand.vmem [shape: s32[48], index: 1, kind: input, shape index: {}]
  %s2 = inlined_call_operand.hbm [shape: s32[384], index: 2, kind: input, shape index: {}]
  %s3 = inlined_call_operand.hbm [shape: f32[111,128], index: 3, kind: input, shape index: {}]
  %s4 = inlined_call_operand.hbm [shape: f32[2,8,128], index: 4, kind: output, shape index: {}]
  %s5 = sld [smem:[#allocation0]]
  $region73: #{tpu_custom_call.1} parent=0
    _
  %s7 = ssub.s32 1, %s5
  %s8 = scalar_select 0, %s7, %s5
  %10 = dma.hbm_to_smem %s0, 16, [#allocation9], [#allocation8]
  %s11 = sshll.u32 %s1, 4
  %s12 = int_to_ptr.vmem [resolvable:$true] %s11
  %14 = dma.vmem_to_smem %s12, 16, [#allocation10], [#allocation8]
  %16 = dma.hbm_to_smem %s2, 48, [#allocation11], [#allocation8]
  %17 = dma.done [#allocation8], 80
  %18 = sfence
  $region1: #{tpu_custom_call.1} parent=0
    #allocation12 [shape = 'u8[8192]{0}', space=vmem, size = 0x2000, scoped, tag = 'output window, operand 0']
    #allocation13 [shape = 's32[2]{0}', space=sflag, size = 0x8, scoped, tag = 'scoped memory for tpu_custom_call.1']
    %19 = vsyncpa [#allocation13], 0
    %s20 = scalar_lea.sflag [#allocation13], 1
    %21 = vsyncpa %s20, 0
    loop: start=0, step=1, limit=7
    $region2: #{tpu_custom_call.1} parent=1 // loop_pre_header
      _
    $region3: #{tpu_custom_call.1} parent=1 // loop_header
      %s23 = sphi 0, %s27
      %p24 = scmp.ge.s32.totalorder %s23, 7
      %s29 = sphi 0, %s39
      %s30 = sphi 0, %s35
      %s31 = sphi 0, %s29
      %s32 = sphi 0, %s30
      %s42 = sphi 0, %s44
      %s45 = sphi 0, %s42
      %s55 = sphi 0, %s45
    $region4: #{tpu_custom_call.1} parent=1 // loop_header_branch
      %26 = sbr.rel (%p24) target = $region8
    $region5: #{tpu_custom_call.1} parent=1 // loop_body
      %s28 = ssub.s32 %s23, 1
      %s33 = sadd.s32 1, %s30
      %p34 = scmp.ge.s32.totalorder %s33, 3
      %s35 = scalar_select %p34, 0, %s33
      %s36 = sadd.s32 1, %s29
      %s37 = scalar_select %p34, %s36, %s29
      %p38 = scmp.ge.s32.totalorder %s37, 2
      %s39 = scalar_select %p38, 0, %s37
      %s40 = ssub.s32 %s29, %s39
      %p41 = scmp.eq.s32.totalorder %s40, 0
      %s43 = sadd.s32 %s42, 1
      %s44 = scalar_select %p41, %s42, %s43
      %p46 = pneg %p41
      %p47 = scmp.eq.s32.totalorder %s23, 5
      %p48 = por %p46, %p47
      %p49 = scmp.ne.s32.totalorder %s42, %s45
      %p50 = scmp.eq.s32.totalorder %s23, 0
      %p51 = por %p49, %p50
      %p52 = scmp.ne.s32.totalorder %s42, %s45
      %p53 = scmp.eq.s32.totalorder %s28, 5
      %p54 = por %p52, %p53
      %p56 = scmp.ne.s32.totalorder %s45, %s55
      %p57 = scmp.eq.s32.totalorder %s28, 0
      %p58 = por %p56, %p57
      %p59 = scmp.lt.s32.totalorder %s23, 6
      // Predicated region
      $region9: #{tpu_custom_call.1} parent=5 // pred_check
        %p60 = pneg %p59
      $region10: #{tpu_custom_call.1} parent=5 // pred_check_branch
        %62 = sbr.rel (%p60) target = $region12
      $region11: #{tpu_custom_call.1} parent=5 // pred_region
        %p63 = pneg %p51
        %p64 = pneg %p48
        %s65 = sand.u32 %s42, 1
        %s66 = scalar_lea.sflag [#allocation13], %s65
        %s67 = sand.u32 %s42, 1
        %s68 = smul.addr %s67, 8
        %s69 = scalar_lea.vmem [#allocation12], %s68
        %p70 = scmp.eq.s32.totalorder %s30, 0
        // Predicated region
        $region13: #{tpu_custom_call.1} parent=11 // pred_check
          %p71 = pneg %p70
        $region14: #{tpu_custom_call.1} parent=11 // pred_check_branch
          %73 = sbr.rel (%p71) target = $region16
        $region15: #{tpu_custom_call.1} parent=11 // pred_region
          %vm74 = vcmask 0
          %75 = vst.msk [vmem:[#allocation6] sm:$0x1] %vm74, 0.0
          %76 = vst.msk [vmem:[#allocation7] sm:$0x1] %vm74, 0.0
        $region16: #{tpu_custom_call.1} parent=11 // pred_fallthru
          _
        %s77 = smul.u32 %s30, 16
        %s78 = smul.u32 %s29, 8
        %s79 = sadd.s32 %s77, %s78
        loop: start=0, step=1, limit=8
        $region17: #{tpu_custom_call.1} parent=11 // loop_pre_header
          _
        $region18: #{tpu_custom_call.1} parent=11 // loop_header
          %s81 = sphi 0, %s85
          %p82 = scmp.ge.s32.totalorder %s81, 8
        $region19: #{tpu_custom_call.1} parent=11 // loop_header_branch
          %84 = sbr.rel (%p82) target = $region23
        $region20: #{tpu_custom_call.1} parent=11 // loop_body
          %s86 = sadd.s32 %s79, %s81
          %s87 = sld [smem:[#allocation9 + %s86]]
          %s88 = smul.u32 %s87, 3
          %s89 = sadd.s32 %s88, %s30
          %s90 = smul.addr %s89, 16
          %s91 = scalar_lea.hbm %s3, %s90
          %s92 = scalar_lea.vmem [#allocation2], %s81
          // Predicated region
          $region24: #{tpu_custom_call.1} parent=20 // pred_check
            _
          $region25: #{tpu_custom_call.1} parent=20 // pred_check_branch
            %94 = sbr.rel target = $region27
          $region26: #{tpu_custom_call.1} parent=20 // pred_region
            %95 = sst [smem:[#allocation16]] [#allocation15]
            %96 = sst [smem:[#allocation17]] [#allocation14]
          $region27: #{tpu_custom_call.1} parent=20 // pred_fallthru
            _
          %98 = shalt.err (0)
          %s100 = sshll.u32 %s92, 4
          %s101 = int_to_ptr.vmem [resolvable:$true] %s100
          %103 = dma.hbm_to_vmem [thread:$0]  %s91, 16, %s101, [#allocation5]
          %s104 = sld [smem:[#allocation10 + %s86]]
          %s105 = smul.u32 %s104, 3
          %s106 = sadd.s32 %s105, %s30
          %s107 = smul.addr %s106, 16
          %s108 = scalar_lea.hbm %s3, %s107
          %s109 = scalar_lea.vmem [#allocation3], %s81
          // Predicated region
          $region28: #{tpu_custom_call.1} parent=20 // pred_check
            _
          $region29: #{tpu_custom_call.1} parent=20 // pred_check_branch
            %111 = sbr.rel target = $region31
          $region30: #{tpu_custom_call.1} parent=20 // pred_region
            %112 = sst [smem:[#allocation16]] [#allocation19]
            %113 = sst [smem:[#allocation17]] [#allocation18]
          $region31: #{tpu_custom_call.1} parent=20 // pred_fallthru
            _
          %115 = shalt.err (0)
          %s117 = sshll.u32 %s109, 4
          %s118 = int_to_ptr.vmem [resolvable:$true] %s117
          %120 = dma.hbm_to_vmem [thread:$0]  %s108, 16, %s118, [#allocation5]
          loop: start=0, step=1, limit=8
          $region32: #{tpu_custom_call.1} parent=20 // loop_pre_header
            _
          $region33: #{tpu_custom_call.1} parent=20 // loop_header
            %s122 = sphi 0, %s126
            %p123 = scmp.ge.s32.totalorder %s122, 8
          $region34: #{tpu_custom_call.1} parent=20 // loop_header_branch
            %125 = sbr.rel (%p123) target = $region38
          $region35: #{tpu_custom_call.1} parent=20 // loop_body
            %s127 = smul.u32 %s86, 8
            %s128 = sadd.s32 %s127, %s122
            %s129 = sld [smem:[#allocation11 + %s128]]
            %s130 = smul.u32 %s129, 3
            %s131 = sadd.s32 %s130, %s30
            %s132 = smul.addr %s131, 16
            %s133 = scalar_lea.hbm %s3, %s132
            %s134 = smul.u32 %s81, 8
            %s135 = sadd.s32 %s122, %s134
            %s136 = scalar_lea.vmem [#allocation4], %s135
            // Predicated region
            $region39: #{tpu_custom_call.1} parent=35 // pred_check
              _
            $region40: #{tpu_custom_call.1} parent=35 // pred_check_branch
              %138 = sbr.rel target = $region42
            $region41: #{tpu_custom_call.1} parent=35 // pred_region
              %139 = sst [smem:[#allocation16]] [#allocation21]
              %140 = sst [smem:[#allocation17]] [#allocation20]
            $region42: #{tpu_custom_call.1} parent=35 // pred_fallthru
              _
            %142 = shalt.err (0)
            %s144 = sshll.u32 %s136, 4
            %s145 = int_to_ptr.vmem [resolvable:$true] %s144
            %147 = dma.hbm_to_vmem [thread:$0]  %s133, 16, %s145, [#allocation5]
          $region36: #{tpu_custom_call.1} parent=20 // loop_footer
            %s126 = sadd.s32 1, %s122
          $region37: #{tpu_custom_call.1} parent=20 // loop_footer_branch
            %121 = sbr.rel target = $region33
          $region38: #{tpu_custom_call.1} parent=20 // loop_exit
            _
        $region21: #{tpu_custom_call.1} parent=11 // loop_footer
          %s85 = sadd.s32 1, %s81
        $region22: #{tpu_custom_call.1} parent=11 // loop_footer_branch
          %80 = sbr.rel target = $region18
        $region23: #{tpu_custom_call.1} parent=11 // loop_exit
          _
        loop: start=0, step=1, limit=8
        $region43: #{tpu_custom_call.1} parent=11 // loop_pre_header
          _
        $region44: #{tpu_custom_call.1} parent=11 // loop_header
          %s149 = sphi 0, %s153
          %p150 = scmp.ge.s32.totalorder %s149, 8
        $region45: #{tpu_custom_call.1} parent=11 // loop_header_branch
          %152 = sbr.rel (%p150) target = $region49
        $region46: #{tpu_custom_call.1} parent=11 // loop_body
          %s154 = smul.u32 1, 1
          %s155 = sshll.u32 %s154, 4
          %156 = dma.done [#allocation5], %s155
          %s157 = sshll.u32 %s154, 4
          %158 = dma.done [#allocation5], %s157
          loop: start=0, step=1, limit=8
          $region50: #{tpu_custom_call.1} parent=46 // loop_pre_header
            _
          $region51: #{tpu_custom_call.1} parent=46 // loop_header
            %s160 = sphi 0, %s164
            %p161 = scmp.ge.s32.totalorder %s160, 8
          $region52: #{tpu_custom_call.1} parent=46 // loop_header_branch
            %163 = sbr.rel (%p161) target = $region56
          $region53: #{tpu_custom_call.1} parent=46 // loop_body
            %s165 = sshll.u32 %s154, 4
            %166 = dma.done [#allocation5], %s165
          $region54: #{tpu_custom_call.1} parent=46 // loop_footer
            %s164 = sadd.s32 1, %s160
          $region55: #{tpu_custom_call.1} parent=46 // loop_footer_branch
            %159 = sbr.rel target = $region51
          $region56: #{tpu_custom_call.1} parent=46 // loop_exit
            _
        $region47: #{tpu_custom_call.1} parent=11 // loop_footer
          %s153 = sadd.s32 1, %s149
        $region48: #{tpu_custom_call.1} parent=11 // loop_footer_branch
          %148 = sbr.rel target = $region44
        $region49: #{tpu_custom_call.1} parent=11 // loop_exit
          _
        %v167 = vld [vmem:[#allocation2] sm:$0xff]
        %v168 = vld [vmem:[#allocation3] sm:$0xff]
        %v169 = vld [vmem:[#allocation4] sm:$0xff]
        %v170 = vld [vmem:[#allocation4 + $0x8] sm:$0xff]
        %v171 = vld [vmem:[#allocation4 + $0x10] sm:$0xff]
        %v172 = vld [vmem:[#allocation4 + $0x18] sm:$0xff]
        %v173 = vld [vmem:[#allocation4 + $0x20] sm:$0xff]
        %v174 = vld [vmem:[#allocation4 + $0x28] sm:$0xff]
        %v175 = vld [vmem:[#allocation4 + $0x30] sm:$0xff]
        %v176 = vld [vmem:[#allocation4 + $0x38] sm:$0xff]
        %v177 = vmul.f32 %v167, %v168
        %178 = vadd.xlane.f32.xlu0 %v177
        %v179 = vpop.xlane.xlu0 %178
        %v181 = vcombine.high %v167, %v167
        %v183 = vunpack.c.l.s4 1966171168
        %v184 = vunpack.c.0.s8 %v183
        %v185 = vlaneseq
        %v186 = vshrl.u32 %v185, 7
        %v187 = vsub.s32 %v184, %v186
        %v188 = vrot.slane %v167, %v187
        %v190 = vunpack.c.l.s4 1966171168
        %v191 = vunpack.c.0.s8 %v190
        %v192 = vlaneseq
        %v193 = vshrl.u32 %v192, 7
        %v194 = vsub.s32 %v191, %v193
        %v195 = vrot.slane %v181, %v194
        %v196 = vcombine.high %v188, %v188
        %v197 = vcombine.high %v195, %v195
        %v199 = vunpack.c.l.s4 1966171168
        %v200 = vunpack.c.0.s8 %v199
        %v201 = vlaneseq
        %v202 = vshrl.u32 %v201, 7
        %v203 = vsub.s32 %v200, %v202
        %v204 = vrot.slane %v188, %v203
        %v206 = vunpack.c.l.s4 1966171168
        %v207 = vunpack.c.0.s8 %v206
        %v208 = vlaneseq
        %v209 = vshrl.u32 %v208, 7
        %v210 = vsub.s32 %v207, %v209
        %v211 = vrot.slane %v195, %v210
        %v213 = vunpack.c.l.s4 1966171168
        %v214 = vunpack.c.0.s8 %v213
        %v215 = vlaneseq
        %v216 = vshrl.u32 %v215, 7
        %v217 = vsub.s32 %v214, %v216
        %v218 = vrot.slane %v196, %v217
        %v220 = vunpack.c.l.s4 1966171168
        %v221 = vunpack.c.0.s8 %v220
        %v222 = vlaneseq
        %v223 = vshrl.u32 %v222, 7
        %v224 = vsub.s32 %v221, %v223
        %v225 = vrot.slane %v197, %v224
        %v226 = vcombine.high %v204, %v204
        %v227 = vcombine.high %v211, %v211
        %v228 = vcombine.high %v218, %v218
        %v229 = vcombine.high %v225, %v225
        %v230 = vlaneseq
        %v231 = vshrl.u32 %v230, 7
        %v232 = vsub.s32 0, %v231
        %v233 = vrot.slane %v204, %v232
        %v234 = vlaneseq
        %v235 = vshrl.u32 %v234, 7
        %v236 = vsub.s32 0, %v235
        %v237 = vrot.slane %v218, %v236
        %v238 = vlaneseq
        %v239 = vshrl.u32 %v238, 7
        %v240 = vsub.s32 0, %v239
        %v241 = vrot.slane %v226, %v240
        %v242 = vlaneseq
        %v243 = vshrl.u32 %v242, 7
        %v244 = vsub.s32 0, %v243
        %v245 = vrot.slane %v228, %v244
        %v246 = vlaneseq
        %v247 = vshrl.u32 %v246, 7
        %v248 = vsub.s32 0, %v247
        %v249 = vrot.slane %v211, %v248
        %v250 = vlaneseq
        %v251 = vshrl.u32 %v250, 7
        %v252 = vsub.s32 0, %v251
        %v253 = vrot.slane %v225, %v252
        %v254 = vlaneseq
        %v255 = vshrl.u32 %v254, 7
        %v256 = vsub.s32 0, %v255
        %v257 = vrot.slane %v227, %v256
        %v258 = vlaneseq
        %v259 = vshrl.u32 %v258, 7
        %v260 = vsub.s32 0, %v259
        %v261 = vrot.slane %v229, %v260
        %v270 = vmul.f32 %v233, %v169
        %v271 = vmul.f32 %v237, %v170
        %v272 = vmul.f32 %v241, %v171
        %v273 = vmul.f32 %v245, %v172
        %v274 = vmul.f32 %v249, %v173
        %v275 = vmul.f32 %v253, %v174
        %v276 = vmul.f32 %v257, %v175
        %v277 = vmul.f32 %v261, %v176
        %278 = vadd.xlane.f32.xlu0 %v270
        %v279 = vpop.xlane.xlu0 %278
        %280 = vadd.xlane.f32.xlu0 %v271
        %v281 = vpop.xlane.xlu0 %280
        %282 = vadd.xlane.f32.xlu0 %v272
        %v283 = vpop.xlane.xlu0 %282
        %284 = vadd.xlane.f32.xlu0 %v273
        %v285 = vpop.xlane.xlu0 %284
        %286 = vadd.xlane.f32.xlu0 %v274
        %v287 = vpop.xlane.xlu0 %286
        %288 = vadd.xlane.f32.xlu0 %v275
        %v289 = vpop.xlane.xlu0 %288
        %290 = vadd.xlane.f32.xlu0 %v276
        %v291 = vpop.xlane.xlu0 %290
        %292 = vadd.xlane.f32.xlu0 %v277
        %v293 = vpop.xlane.xlu0 %292
        %v294 = vsub.f32 0.0, %v279
        %v295 = vsub.f32 0.0, %v281
        %v296 = vsub.f32 0.0, %v283
        %v297 = vsub.f32 0.0, %v285
        %v298 = vsub.f32 0.0, %v287
        %v299 = vsub.f32 0.0, %v289
        %v300 = vsub.f32 0.0, %v291
        %v301 = vsub.f32 0.0, %v293
        %vm302 = vcmp.ne.f32.partialorder %v179, %v179
        %v303 = vsel %vm302, 0.5, %v179
        %vm304 = vcmp.ne.f32.partialorder %v294, %v294
        %vm305 = vcmp.ne.f32.partialorder %v295, %v295
        %vm306 = vcmp.ne.f32.partialorder %v296, %v296
        %vm307 = vcmp.ne.f32.partialorder %v297, %v297
        %vm308 = vcmp.ne.f32.partialorder %v298, %v298
        %vm309 = vcmp.ne.f32.partialorder %v299, %v299
        %vm310 = vcmp.ne.f32.partialorder %v300, %v300
        %vm311 = vcmp.ne.f32.partialorder %v301, %v301
        %v312 = vsel %vm304, 0.5, %v294
        %v313 = vsel %vm305, 0.5, %v295
        %v314 = vsel %vm306, 0.5, %v296
        %v315 = vsel %vm307, 0.5, %v297
        %v316 = vsel %vm308, 0.5, %v298
        %v317 = vsel %vm309, 0.5, %v299
        %v318 = vsel %vm310, 0.5, %v300
        %v319 = vsel %vm311, 0.5, %v301
        %v320 = vmax.f32 %v303, 0.0
        %v321 = vsub.f32 %v320, %v303
        %v322 = vand.u32 2147483647, %v303
        %v323 = vsub.f32 0.0, %v322
        %v324 = vmul.f32 %v323, 1.442695
        %v325 = vpow.pop %v324
        %v326 = vadd.f32 %v325, 1.0
        %v327 = vlog2.pop %v326
        %v328 = vmul.f32 %v327, 0.6931472
        %v329 = vmul.f32 -0.5, %v325
        %v330 = vadd.f32 %v329, 1.0
        %v331 = vmul.f32 %v330, %v325
        %v332 = vand.u32 2147483647, %v325
        %vm333 = vcmp.lt.f32.partialorder %v332, 0.0004427343
        %v334 = vsel %vm333, %v331, %v328
        %v335 = vadd.f32 %v321, %v334
        %v336 = vmax.f32 %v312, 0.0
        %v337 = vmax.f32 %v313, 0.0
        %v338 = vmax.f32 %v314, 0.0
        %v339 = vmax.f32 %v315, 0.0
        %v340 = vmax.f32 %v316, 0.0
        %v341 = vmax.f32 %v317, 0.0
        %v342 = vmax.f32 %v318, 0.0
        %v343 = vmax.f32 %v319, 0.0
        %v344 = vsub.f32 %v336, %v312
        %v345 = vsub.f32 %v337, %v313
        %v346 = vsub.f32 %v338, %v314
        %v347 = vsub.f32 %v339, %v315
        %v348 = vsub.f32 %v340, %v316
        %v349 = vsub.f32 %v341, %v317
        %v350 = vsub.f32 %v342, %v318
        %v351 = vsub.f32 %v343, %v319
        %v352 = vand.u32 2147483647, %v312
        %v353 = vand.u32 2147483647, %v313
        %v354 = vand.u32 2147483647, %v314
        %v355 = vand.u32 2147483647, %v315
        %v356 = vand.u32 2147483647, %v316
        %v357 = vand.u32 2147483647, %v317
        %v358 = vand.u32 2147483647, %v318
        %v359 = vand.u32 2147483647, %v319
        %v360 = vsub.f32 0.0, %v352
        %v361 = vsub.f32 0.0, %v353
        %v362 = vsub.f32 0.0, %v354
        %v363 = vsub.f32 0.0, %v355
        %v364 = vsub.f32 0.0, %v356
        %v365 = vsub.f32 0.0, %v357
        %v366 = vsub.f32 0.0, %v358
        %v367 = vsub.f32 0.0, %v359
        %v368 = vmul.f32 %v360, 1.442695
        %v369 = vpow.pop %v368
        %v370 = vmul.f32 %v361, 1.442695
        %v371 = vpow.pop %v370
        %v372 = vmul.f32 %v362, 1.442695
        %v373 = vpow.pop %v372
        %v374 = vmul.f32 %v363, 1.442695
        %v375 = vpow.pop %v374
        %v376 = vmul.f32 %v364, 1.442695
        %v377 = vpow.pop %v376
        %v378 = vmul.f32 %v365, 1.442695
        %v379 = vpow.pop %v378
        %v380 = vmul.f32 %v366, 1.442695
        %v381 = vpow.pop %v380
        %v382 = vmul.f32 %v367, 1.442695
        %v383 = vpow.pop %v382
        %v384 = vadd.f32 %v369, 1.0
        %v385 = vlog2.pop %v384
        %v386 = vmul.f32 %v385, 0.6931472
        %v387 = vmul.f32 -0.5, %v369
        %v388 = vadd.f32 %v387, 1.0
        %v389 = vmul.f32 %v388, %v369
        %v390 = vand.u32 2147483647, %v369
        %vm391 = vcmp.lt.f32.partialorder %v390, 0.0004427343
        %v392 = vsel %vm391, %v389, %v386
        %v393 = vadd.f32 %v371, 1.0
        %v394 = vlog2.pop %v393
        %v395 = vmul.f32 %v394, 0.6931472
        %v396 = vmul.f32 -0.5, %v371
        %v397 = vadd.f32 %v396, 1.0
        %v398 = vmul.f32 %v397, %v371
        %v399 = vand.u32 2147483647, %v371
        %vm400 = vcmp.lt.f32.partialorder %v399, 0.0004427343
        %v401 = vsel %vm400, %v398, %v395
        %v402 = vadd.f32 %v373, 1.0
        %v403 = vlog2.pop %v402
        %v404 = vmul.f32 %v403, 0.6931472
        %v405 = vmul.f32 -0.5, %v373
        %v406 = vadd.f32 %v405, 1.0
        %v407 = vmul.f32 %v406, %v373
        %v408 = vand.u32 2147483647, %v373
        %vm409 = vcmp.lt.f32.partialorder %v408, 0.0004427343
        %v410 = vsel %vm409, %v407, %v404
        %v411 = vadd.f32 %v375, 1.0
        %v412 = vlog2.pop %v411
        %v413 = vmul.f32 %v412, 0.6931472
        %v414 = vmul.f32 -0.5, %v375
        %v415 = vadd.f32 %v414, 1.0
        %v416 = vmul.f32 %v415, %v375
        %v417 = vand.u32 2147483647, %v375
        %vm418 = vcmp.lt.f32.partialorder %v417, 0.0004427343
        %v419 = vsel %vm418, %v416, %v413
        %v420 = vadd.f32 %v377, 1.0
        %v421 = vlog2.pop %v420
        %v422 = vmul.f32 %v421, 0.6931472
        %v423 = vmul.f32 -0.5, %v377
        %v424 = vadd.f32 %v423, 1.0
        %v425 = vmul.f32 %v424, %v377
        %v426 = vand.u32 2147483647, %v377
        %vm427 = vcmp.lt.f32.partialorder %v426, 0.0004427343
        %v428 = vsel %vm427, %v425, %v422
        %v429 = vadd.f32 %v379, 1.0
        %v430 = vlog2.pop %v429
        %v431 = vmul.f32 %v430, 0.6931472
        %v432 = vmul.f32 -0.5, %v379
        %v433 = vadd.f32 %v432, 1.0
        %v434 = vmul.f32 %v433, %v379
        %v435 = vand.u32 2147483647, %v379
        %vm436 = vcmp.lt.f32.partialorder %v435, 0.0004427343
        %v437 = vsel %vm436, %v434, %v431
        %v438 = vadd.f32 %v381, 1.0
        %v439 = vlog2.pop %v438
        %v440 = vmul.f32 %v439, 0.6931472
        %v441 = vmul.f32 -0.5, %v381
        %v442 = vadd.f32 %v441, 1.0
        %v443 = vmul.f32 %v442, %v381
        %v444 = vand.u32 2147483647, %v381
        %vm445 = vcmp.lt.f32.partialorder %v444, 0.0004427343
        %v446 = vsel %vm445, %v443, %v440
        %v447 = vadd.f32 %v383, 1.0
        %v448 = vlog2.pop %v447
        %v449 = vmul.f32 %v448, 0.6931472
        %v450 = vmul.f32 -0.5, %v383
        %v451 = vadd.f32 %v450, 1.0
        %v452 = vmul.f32 %v451, %v383
        %v453 = vand.u32 2147483647, %v383
        %vm454 = vcmp.lt.f32.partialorder %v453, 0.0004427343
        %v455 = vsel %vm454, %v452, %v449
        %v456 = vadd.f32 %v344, %v392
        %v457 = vadd.f32 %v345, %v401
        %v458 = vadd.f32 %v346, %v410
        %v459 = vadd.f32 %v347, %v419
        %v460 = vadd.f32 %v348, %v428
        %v461 = vadd.f32 %v349, %v437
        %v462 = vadd.f32 %v350, %v446
        %v463 = vadd.f32 %v351, %v455
        %v464 = vlaneseq
        %v465 = vshrl.u32 %v464, 7
        %v466 = vstv %s78
        %v467 = vadd.s32 %v466, %v465
        %vm468 = vcmp.lt.s32.totalorder %v467, 12
        %v469 = vsel %vm468, 1, 0
        %v470 = vcvt.s32.f32 %v469
        %v471 = vld [vmem:[#allocation6] sm:$0x1]
        %v472 = vmul.f32 %v335, %v470
        %vm473 = vcmask 7168
        %v474 = vsel %vm473, %v472, 0.0
        %475 = vadd.xlane.f32.xlu0 %v474
        %v476 = vpop.xlane.xlu0 %475
        %v477 = vrot.slane %v476, 4
        %v478 = vadd.f32 %v476, %v477
        %v479 = vrot.slane %v478, 2
        %v480 = vadd.f32 %v478, %v479
        %v481 = vrot.slane %v480, 1
        %v482 = vadd.f32 %v480, %v481
        %s483 = vtos %v482
        %v484 = vstv %s483
        %v485 = vadd.f32 %v471, %v484
        %vm486 = vcmask 0
        %487 = vst.msk [vmem:[#allocation6] sm:$0x1] %vm486, %v485
        %v488 = vld [vmem:[#allocation7] sm:$0x1]
        %v490 = vlaneseq
        %v491 = vshrl.u32 %v490, 7
        %v492 = vsub.s32 0, %v491
        %v493 = vrot.slane %v470, %v492
        %v494 = vlaneseq
        %v495 = vshrl.u32 %v494, 7
        %v496 = vsub.s32 1, %v495
        %v497 = vrot.slane %v470, %v496
        %v498 = vlaneseq
        %v499 = vshrl.u32 %v498, 7
        %v500 = vsub.s32 2, %v499
        %v501 = vrot.slane %v470, %v500
        %v502 = vlaneseq
        %v503 = vshrl.u32 %v502, 7
        %v504 = vsub.s32 3, %v503
        %v505 = vrot.slane %v470, %v504
        %v506 = vlaneseq
        %v507 = vshrl.u32 %v506, 7
        %v508 = vsub.s32 4, %v507
        %v509 = vrot.slane %v470, %v508
        %v510 = vlaneseq
        %v511 = vshrl.u32 %v510, 7
        %v512 = vsub.s32 5, %v511
        %v513 = vrot.slane %v470, %v512
        %v514 = vlaneseq
        %v515 = vshrl.u32 %v514, 7
        %v516 = vsub.s32 6, %v515
        %v517 = vrot.slane %v470, %v516
        %v518 = vlaneseq
        %v519 = vshrl.u32 %v518, 7
        %v520 = vsub.s32 7, %v519
        %v521 = vrot.slane %v470, %v520
        %v530 = vmul.f32 %v456, %v493
        %v531 = vmul.f32 %v457, %v497
        %v532 = vmul.f32 %v458, %v501
        %v533 = vmul.f32 %v459, %v505
        %v534 = vmul.f32 %v460, %v509
        %v535 = vmul.f32 %v461, %v513
        %v536 = vmul.f32 %v462, %v517
        %v537 = vmul.f32 %v463, %v521
        %546 = vset.pattern.permute.xlu0 0
        %547 = vperm.xlu0 %546, %v530
        %v548 = vpop.permute.xlu0 %547
        %549 = vset.pattern.permute.xlu0 0
        %550 = vperm.xlu0 %549, %v531
        %v551 = vpop.permute.xlu0 %550
        %552 = vset.pattern.permute.xlu0 0
        %553 = vperm.xlu0 %552, %v532
        %v554 = vpop.permute.xlu0 %553
        %555 = vset.pattern.permute.xlu0 0
        %556 = vperm.xlu0 %555, %v533
        %v557 = vpop.permute.xlu0 %556
        %558 = vset.pattern.permute.xlu0 0
        %559 = vperm.xlu0 %558, %v534
        %v560 = vpop.permute.xlu0 %559
        %561 = vset.pattern.permute.xlu0 0
        %562 = vperm.xlu0 %561, %v535
        %v563 = vpop.permute.xlu0 %562
        %564 = vset.pattern.permute.xlu0 0
        %565 = vperm.xlu0 %564, %v536
        %v566 = vpop.permute.xlu0 %565
        %567 = vset.pattern.permute.xlu0 0
        %568 = vperm.xlu0 %567, %v537
        %v569 = vpop.permute.xlu0 %568
        %v570 = vlaneseq
        %v571 = vand.u32 %v570, 127
        %v572 = vlaneseq
        %v573 = vshrl.u32 %v572, 7
        %v574 = vsub.s32 %v571, %v573
        %v575 = vrot.slane %v548, %v574
        %v576 = vlaneseq
        %v577 = vshrl.u32 %v576, 7
        %v578 = vsub.s32 %v571, %v577
        %v579 = vrot.slane %v551, %v578
        %v580 = vlaneseq
        %v581 = vshrl.u32 %v580, 7
        %v582 = vsub.s32 %v571, %v581
        %v583 = vrot.slane %v554, %v582
        %v584 = vlaneseq
        %v585 = vshrl.u32 %v584, 7
        %v586 = vsub.s32 %v571, %v585
        %v587 = vrot.slane %v557, %v586
        %v588 = vlaneseq
        %v589 = vshrl.u32 %v588, 7
        %v590 = vsub.s32 %v571, %v589
        %v591 = vrot.slane %v560, %v590
        %v592 = vlaneseq
        %v593 = vshrl.u32 %v592, 7
        %v594 = vsub.s32 %v571, %v593
        %v595 = vrot.slane %v563, %v594
        %v596 = vlaneseq
        %v597 = vshrl.u32 %v596, 7
        %v598 = vsub.s32 %v571, %v597
        %v599 = vrot.slane %v566, %v598
        %v600 = vlaneseq
        %v601 = vshrl.u32 %v600, 7
        %v602 = vsub.s32 %v571, %v601
        %v603 = vrot.slane %v569, %v602
        %vm604 = vcmask 1041409
        %v605 = vsel %vm604, %v579, %v575
        %vm606 = vcmask 1042434
        %v607 = vsel %vm606, %v583, %v605
        %vm608 = vcmask 1043459
        %v609 = vsel %vm608, %v587, %v607
        %vm610 = vcmask 1044484
        %v611 = vsel %vm610, %v591, %v609
        %vm612 = vcmask 1045509
        %v613 = vsel %vm612, %v595, %v611
        %vm614 = vcmask 1046534
        %v615 = vsel %vm614, %v599, %v613
        %vm616 = vcmask 1047559
        %v617 = vsel %vm616, %v603, %v615
        %vm619 = vcmask 64512
        %v620 = vsel %vm619, %v617, 0.0
        %621 = vadd.xlane.f32.xlu0 %v620
        %v622 = vpop.xlane.xlu0 %621
        %v623 = vrot.slane %v622, 4
        %v624 = vadd.f32 %v622, %v623
        %v625 = vrot.slane %v624, 2
        %v626 = vadd.f32 %v624, %v625
        %v627 = vrot.slane %v626, 1
        %v628 = vadd.f32 %v626, %v627
        %s629 = vtos %v628
        %v630 = vstv %s629
        %v631 = vadd.f32 %v488, %v630
        %632 = vst.msk [vmem:[#allocation7] sm:$0x1] %vm486, %v631
        %p633 = scmp.eq.s32.totalorder %s30, 2
        // Predicated region
        $region57: #{tpu_custom_call.1} parent=11 // pred_check
          %p634 = pneg %p633
        $region58: #{tpu_custom_call.1} parent=11 // pred_check_branch
          %636 = sbr.rel (%p634) target = $region60
        $region59: #{tpu_custom_call.1} parent=11 // pred_region
          %v637 = vld [vmem:[#allocation6] sm:$0x1]
          %v638 = vmul.f32 %v637, 0.083333336
          %v639 = vld [vmem:[#allocation7] sm:$0x1]
          %v640 = vmul.f32 %v639, 0.010416667
          %v641 = vmul.f32 %v640, 0.7
          %v642 = vadd.f32 %v638, %v641
          %v644 = vlaneseq
          %v645 = vshrl.u32 %v644, 7
          %v646 = vsub.s32 0, %v645
          %v647 = vrot.slane %v642, %v646
          %648 = vset.pattern.permute.xlu0 0
          %649 = vperm.xlu0 %648, %v647
          %v650 = vpop.permute.xlu0 %649
          %652 = vst [vmem:[%s69] sm:$0xff] %v650
        $region60: #{tpu_custom_call.1} parent=11 // pred_fallthru
          _
        %s653 = sand.u32 %s42, 1
        %s654 = scalar_lea.sflag [#allocation13], %s653
        %s655 = sand.u32 %s42, 1
        %s656 = smul.addr %s655, 8
        %s657 = scalar_lea.vmem [#allocation12], %s656
        // Predicated region
        $region61: #{tpu_custom_call.1} parent=11 // pred_check
          %p658 = pneg %p48
        $region62: #{tpu_custom_call.1} parent=11 // pred_check_branch
          %660 = sbr.rel (%p658) target = $region64
        $region63: #{tpu_custom_call.1} parent=11 // pred_region
          %s662 = ssub.s32 128, 128
          %663 = vsyncadd %s654, %s662
          %s664 = smul.addr %s29, 128
          %s665 = scalar_lea.hbm %s4, %s664
          %s667 = sshll.u32 %s657, 4
          %s668 = int_to_ptr.vmem [resolvable:$true] %s667
          %670 = dma.vmem_to_hbm [thread:$0]  %s668, 128, %s665, %s654
        $region64: #{tpu_custom_call.1} parent=11 // pred_fallthru
          _
      $region12: #{tpu_custom_call.1} parent=5 // pred_fallthru
        _
      %p671 = scmp.le.s32.totalorder 1, %s23
      // Predicated region
      $region65: #{tpu_custom_call.1} parent=5 // pred_check
        %p672 = pneg %p671
      $region66: #{tpu_custom_call.1} parent=5 // pred_check_branch
        %674 = sbr.rel (%p672) target = $region68
      $region67: #{tpu_custom_call.1} parent=5 // pred_region
        %s675 = ssub.s32 %s23, 1
        // Predicated region
        $region69: #{tpu_custom_call.1} parent=67 // pred_check
          %p676 = pneg %p54
        $region70: #{tpu_custom_call.1} parent=67 // pred_check_branch
          %678 = sbr.rel (%p676) target = $region72
        $region71: #{tpu_custom_call.1} parent=67 // pred_region
          %s679 = sand.u32 %s45, 1
          %s680 = scalar_lea.sflag [#allocation13], %s679
          %s681 = sand.u32 %s45, 1
          %s682 = smul.addr %s681, 8
          %s683 = scalar_lea.vmem [#allocation12], %s682
          %684 = dma.done %s680, 128
        $region72: #{tpu_custom_call.1} parent=67 // pred_fallthru
          _
      $region68: #{tpu_custom_call.1} parent=5 // pred_fallthru
        _
    $region6: #{tpu_custom_call.1} parent=1 // loop_footer
      %s27 = sadd.s32 1, %s23
    $region7: #{tpu_custom_call.1} parent=1 // loop_footer_branch
      %22 = sbr.rel target = $region3
    $region8: #{tpu_custom_call.1} parent=1 // loop_exit
      _
    %685 = vsyncpa [#allocation13], 1
    %s686 = scalar_lea.sflag [#allocation13], 1
    %687 = vsyncpa %s686, 1
  %688 = vsyncmov [#allocation5]
  %s689 = vpop.sfrf %688
  %p690 = scmp.eq.s32.totalorder %s689, 0
  %p691 = pneg %p690
  %693 = shalt.err (%p691)

</llo_original>
